<compile_context>
chip_gen: v6e
topology: v6e:2x2x1
jax: 0.10.0
libtpu: 0.0.40
codegen_flags: <defaults>
</compile_context>

<pallas_src>
import functools

import jax
import jax.numpy as jnp
from jax.experimental import pallas as pl
from jax.experimental.pallas import tpu as pltpu

LN_EPS = 1e-5  # torch nn.LayerNorm default


def _round_up(a, b):
    return ((a + b - 1) // b) * b


def _invariant_spec_factory():
    """Static capability check for single-buffered grid-invariant operands."""
    try:
        _ = pl.BlockSpec((1, 128), lambda i, k: (0, 0),
                         pipeline_mode=pl.Buffered(1))

        def make(shape):
            return pl.BlockSpec(shape, lambda i, k: (0, 0),
                                pipeline_mode=pl.Buffered(1))
    except Exception:
        def make(shape):
            return pl.BlockSpec(shape, lambda i, k: (0, 0))
    return make


_invariant_spec = _invariant_spec_factory()


def ffn_kernel(x_ref, w1_ref, b1_ref, w2_ref, b2_ref, gamma_ref, beta_ref,
               o_ref, acc_ref, *, mxu_dtype, inv_d):
    """One (row_tile, D_pad) slab of positions x one tk-wide chunk of H."""
    k = pl.program_id(1)

    x = x_ref[...]                                            # (TM, Dp)

    # fc1 chunk + ReLU  (MXU matmul, f32 accumulate; epilogue stays f32)
    h = jnp.dot(x.astype(mxu_dtype), w1_ref[...],
                preferred_element_type=jnp.float32)
    h = jnp.maximum(h + b1_ref[...], 0.0)                     # (TM, tk) f32

    # fc2 partial product for this hidden chunk
    part = jnp.dot(h.astype(mxu_dtype), w2_ref[...],
                   preferred_element_type=jnp.float32)        # (TM, Dp) f32

    @pl.when(k == 0)
    def _():
        acc_ref[...] = part

    @pl.when(k > 0)
    def _():
        acc_ref[...] += part

    # Epilogue: bias + residual + LayerNorm, f32 on VPU/EUP (v5e-safe).
    @pl.when(k == pl.num_programs(1) - 1)
    def _():
        y = acc_ref[...] + b2_ref[...] + x.astype(jnp.float32)
        # Fused single-pass statistics.  Padded lanes of y are exact zeros
        # (W2 cols / b2 / x lanes were zero-padded), so summing all lanes and
        # dividing by the true D gives the correct mean/variance.
        s1 = jnp.sum(y, axis=-1, keepdims=True)
        s2 = jnp.sum(y * y, axis=-1, keepdims=True)
        mean = s1 * inv_d
        var = jnp.maximum(s2 * inv_d - mean * mean, 0.0)
        scale = jax.lax.rsqrt(var + LN_EPS) * gamma_ref[...]  # gamma folded in
        o_ref[...] = ((y - mean) * scale + beta_ref[...]).astype(o_ref.dtype)


def _choose_tiles(n_rows, d_pad, hidden, mxu_itemsize, row_tile, tk):
    """Generation-aware tile sizing (v7x: 64 MiB/TC; v5e/v6e: 128 MiB)."""
    try:
        vmem_cap = pltpu.get_tpu_info().vmem_capacity_bytes
    except Exception:
        vmem_cap = 64 << 20
    target = int(0.70 * vmem_cap)

    if row_tile is None:
        row_tile = 512 if vmem_cap >= (100 << 20) else 256    # v5e/v6e vs v7x
    if n_rows <= row_tile:
        row_tile = n_rows                                     # single row block
    else:
        row_tile = max(8, (row_tile // 8) * 8)

    h_pad128 = _round_up(hidden, 128)
    if tk is None:
        tk = 1024
    tk = min(_round_up(tk, 128), h_pad128)

    def budget(rt, tkk):
        wts = 2 * 2 * d_pad * tkk * mxu_itemsize   # W1 + W2 chunk, double-buffered
        vecs = 2 * tkk * 4 + 6 * d_pad * 4         # b1 chunk (x2), b2/gamma/beta
        io = 2 * 2 * rt * d_pad * 4                # x + out row tiles, double-buffered
        acc = rt * d_pad * 4                       # accumulator scratch
        live = rt * (tkk + d_pad) * 4              # h / partial-product intermediates
        return wts + vecs + io + acc + live + (2 << 20)

    # Shrink the hidden chunk first, then the row tile, until it fits.
    while budget(row_tile, tk) > target and tk > 128:
        tk = _round_up(max(128, tk // 2), 128)
    while budget(row_tile, tk) > target and row_tile > 64 and row_tile < n_rows:
        row_tile = max(64, (row_tile // 2 // 8) * 8)

    return row_tile, tk, budget(row_tile, tk), vmem_cap


@functools.partial(jax.jit, static_argnames=("row_tile", "tk", "mxu_dtype"))
def _ffn_impl(x, w1, b1, w2, b2, gamma, beta, *, row_tile, tk, mxu_dtype):
    batch, seq, dim_model = x.shape
    hidden = w1.shape[1]
    n_rows = batch * seq

    if mxu_dtype is None:
        # bf16 MXU on all generations (v5e/v6e/v7x are bf16-native).
        mxu_dtype = jnp.bfloat16
    mxu_dtype = jnp.dtype(mxu_dtype)

    d_pad = _round_up(dim_model, 128)
    row_tile, tk, vmem_budget, vmem_cap = _choose_tiles(
        n_rows, d_pad, hidden, mxu_dtype.itemsize, row_tile, tk)
    h_pad = _round_up(hidden, tk)
    num_k = h_pad // tk
    grid = (pl.cdiv(n_rows, row_tile), num_k)   # rows parallel, K last/arbitrary

    # Lane-dense feature padding (zeros), fused on device under jit.
    x2 = x.reshape(n_rows, dim_model)
    if d_pad != dim_model:
        x2 = jnp.pad(x2, ((0, 0), (0, d_pad - dim_model)))
    w1p = w1.astype(mxu_dtype)
    w2p = w2.astype(mxu_dtype)
    if d_pad != dim_model or h_pad != hidden:
        w1p = jnp.pad(w1p, ((0, d_pad - dim_model), (0, h_pad - hidden)))
        w2p = jnp.pad(w2p, ((0, h_pad - hidden), (0, d_pad - dim_model)))
    b1p = b1.astype(jnp.float32).reshape(1, hidden)
    if h_pad != hidden:
        b1p = jnp.pad(b1p, ((0, 0), (0, h_pad - hidden)))

    def pad_vec(v):
        v = v.astype(jnp.float32).reshape(1, dim_model)
        if d_pad != dim_model:
            v = jnp.pad(v, ((0, 0), (0, d_pad - dim_model)))
        return v

    b2p, gammap, betap = pad_vec(b2), pad_vec(gamma), pad_vec(beta)

    vmem_limit = int(min(0.92 * vmem_cap,
                         max(vmem_budget + (8 << 20), 48 << 20)))

    call = pl.pallas_call(
        functools.partial(ffn_kernel, mxu_dtype=mxu_dtype,
                          inv_d=1.0 / dim_model),
        out_shape=jax.ShapeDtypeStruct((n_rows, d_pad), x.dtype),
        grid_spec=pltpu.PrefetchScalarGridSpec(
            num_scalar_prefetch=0,
            grid=grid,
            in_specs=[
                pl.BlockSpec((row_tile, d_pad), lambda i, k: (i, 0)),  # x rows
                pl.BlockSpec((d_pad, tk), lambda i, k: (0, k)),        # W1 chunk
                pl.BlockSpec((1, tk), lambda i, k: (0, k)),            # b1 chunk
                pl.BlockSpec((tk, d_pad), lambda i, k: (k, 0)),        # W2 chunk
                _invariant_spec((1, d_pad)),                           # b2
                _invariant_spec((1, d_pad)),                           # ln gamma
                _invariant_spec((1, d_pad)),                           # ln beta
            ],
            out_specs=pl.BlockSpec((row_tile, d_pad), lambda i, k: (i, 0)),
            scratch_shapes=[pltpu.VMEM((row_tile, d_pad), jnp.float32)],
        ),
        compiler_params=pltpu.CompilerParams(
            dimension_semantics=("parallel", "arbitrary"),
            vmem_limit_bytes=vmem_limit,
        ),
    )

    out = call(x2, w1p, b1p, w2p, b2p, gammap, betap)
    if d_pad != dim_model:
        out = out[:, :dim_model]
    return out.reshape(batch, seq, dim_model)


def position_wise_feed_forward(x, w1, b1, w2, b2, gamma, beta, *,
                               row_tile=None, tk=None, mxu_dtype=None):
    """Pallas TPU FFN block: LayerNorm(fc2(relu(fc1(x))) + x).

    x: (batch, seq, dim_model).  Weights follow y = x @ W + b.
    row_tile / tk: row-tile and hidden-chunk sizes (auto-sized from VMEM
    capacity when None).  mxu_dtype: dtype fed to the MXU (default bfloat16
    on all TPU generations); the epilogue always runs in float32.
    """
    # TODO(synk): optional bf16 activation I/O (halves HBM traffic when the
    # kernel is HBM-bound) and an fp8 weight path for v7x are not implemented.
    return _ffn_impl(x, w1, b1, w2, b2, gamma, beta,
                     row_tile=row_tile, tk=tk, mxu_dtype=mxu_dtype)


def reference(x, w1, b1, w2, b2, gamma, beta):
    h = jnp.maximum(x @ w1 + b1, 0.0)
    y = h @ w2 + b2 + x
    mean = jnp.mean(y, axis=-1, keepdims=True)
    var = jnp.mean((y - mean) ** 2, axis=-1, keepdims=True)
    return (y - mean) * jax.lax.rsqrt(var + LN_EPS) * gamma + beta


if __name__ == "__main__":
    # --- Small shapes consistent with the module: dim_model=32, hidden=64 ---
    batch, seq, dim_model, hidden = 2, 8, 32, 64

    key = jax.random.PRNGKey(0)
    kx, kw1, kb1, kw2, kb2 = jax.random.split(key, 5)

    x = jax.random.normal(kx, (batch, seq, dim_model), dtype=jnp.float32)
    lim1 = 1.0 / jnp.sqrt(dim_model)
    lim2 = 1.0 / jnp.sqrt(hidden)
    w1 = jax.random.uniform(kw1, (dim_model, hidden), jnp.float32, -lim1, lim1)
    b1 = jax.random.uniform(kb1, (hidden,), jnp.float32, -lim1, lim1)
    w2 = jax.random.uniform(kw2, (hidden, dim_model), jnp.float32, -lim2, lim2)
    b2 = jax.random.uniform(kb2, (dim_model,), jnp.float32, -lim2, lim2)
    gamma = jnp.ones((dim_model,), jnp.float32)   # nn.LayerNorm default init
    beta = jnp.zeros((dim_model,), jnp.float32)

    ref = reference(x, w1, b1, w2, b2, gamma, beta)

    # 1) f32 MXU path (lane-padded D=32 -> 128) -- tight tolerance.
    out_f32 = position_wise_feed_forward(x, w1, b1, w2, b2, gamma, beta,
                                         mxu_dtype=jnp.float32)
    out_f32 = jax.block_until_ready(out_f32)
    assert out_f32.shape == x.shape
    assert jnp.allclose(out_f32, ref, atol=1e-4, rtol=1e-4)

    # 2) Default path: bf16 MXU (all generations), f32 epilogue -- loose tol.
    out_bf16 = position_wise_feed_forward(x, w1, b1, w2, b2, gamma, beta)
    out_bf16 = jax.block_until_ready(out_bf16)
    assert jnp.allclose(out_bf16, ref, atol=1e-1, rtol=1e-1)

    # 3) Multi row-block grid (partial tail block, no wrapper row-padding) +
    #    hidden-axis accumulation (num_k = 2).
    batch2, seq2, dm2, hd2 = 2, 100, 128, 256
    kx2, kw12, kb12, kw22, kb22 = jax.random.split(jax.random.PRNGKey(1), 5)
    x_l = jax.random.normal(kx2, (batch2, seq2, dm2), dtype=jnp.float32)
    l1 = 1.0 / jnp.sqrt(dm2)
    l2 = 1.0 / jnp.sqrt(hd2)
    w1_l = jax.random.uniform(kw12, (dm2, hd2), jnp.float32, -l1, l1)
    b1_l = jax.random.uniform(kb12, (hd2,), jnp.float32, -l1, l1)
    w2_l = jax.random.uniform(kw22, (hd2, dm2), jnp.float32, -l2, l2)
    b2_l = jax.random.uniform(kb22, (dm2,), jnp.float32, -l2, l2)
    g_l = jnp.ones((dm2,), jnp.float32)
    be_l = jnp.zeros((dm2,), jnp.float32)

    out_l = position_wise_feed_forward(x_l, w1_l, b1_l, w2_l, b2_l, g_l, be_l,
                                       row_tile=128, tk=128,
                                       mxu_dtype=jnp.float32)
    out_l = jax.block_until_ready(out_l)
    ref_l = reference(x_l, w1_l, b1_l, w2_l, b2_l, g_l, be_l)
    assert jnp.allclose(out_l, ref_l, atol=1e-3, rtol=1e-3)

    print("KERNEL_OK")
</pallas_src>

<mosaic_0001>
module attributes {stable_mosaic.version = 11 : i64} {
  func.func @ffn_kernel(%arg0: i32, %arg1: i32, %arg2: memref<16x128xf32, #tpu.memory_space<vmem>>, %arg3: memref<128x128xf32, #tpu.memory_space<vmem>>, %arg4: memref<1x128xf32, #tpu.memory_space<vmem>>, %arg5: memref<128x128xf32, #tpu.memory_space<vmem>>, %arg6: memref<1x128xf32, #tpu.memory_space<vmem>>, %arg7: memref<1x128xf32, #tpu.memory_space<vmem>>, %arg8: memref<1x128xf32, #tpu.memory_space<vmem>>, %arg9: memref<16x128xf32, #tpu.memory_space<vmem>>, %arg10: memref<16x128xf32, #tpu.memory_space<vmem>>) attributes {dimension_semantics = [#tpu.dimension_semantics<parallel>, #tpu.dimension_semantics<arbitrary>], iteration_bounds = array<i64: 1, 1>, scalar_prefetch = 0 : i64, scratch_operands = 1 : i64, tpu.core_type = #tpu.core_type<tc>, window_params = [{transform_indices = @transform_0, window_bounds = array<i64: 16, 128>}, {transform_indices = @transform_1, window_bounds = array<i64: 128, 128>}, {transform_indices = @transform_2, window_bounds = array<i64: 1, 128>}, {transform_indices = @transform_3, window_bounds = array<i64: 128, 128>}, {pipeline_mode = #tpu.pipeline_mode<synchronous>, transform_indices = @transform_4, window_bounds = array<i64: 1, 128>}, {pipeline_mode = #tpu.pipeline_mode<synchronous>, transform_indices = @transform_5, window_bounds = array<i64: 1, 128>}, {pipeline_mode = #tpu.pipeline_mode<synchronous>, transform_indices = @transform_6, window_bounds = array<i64: 1, 128>}, {transform_indices = @transform_7, window_bounds = array<i64: 16, 128>}]} {
    %c0 = arith.constant 0 : index
    %c0_0 = arith.constant 0 : index
    %0 = vector.load %arg2[%c0, %c0_0] : memref<16x128xf32, #tpu.memory_space<vmem>>, vector<16x128xf32>
    %c0_1 = arith.constant 0 : index
    %c0_2 = arith.constant 0 : index
    %1 = vector.load %arg3[%c0_1, %c0_2] : memref<128x128xf32, #tpu.memory_space<vmem>>, vector<128x128xf32>
    %cst = arith.constant dense<0.000000e+00> : vector<16x128xf32>
    %2 = tpu.matmul %0, %1, %cst {dimension_numbers = #tpu.dot_dimension_numbers<[1], [0], [0], [1], [0, 0, 1, 1], [], []>} : vector<16x128xf32>, vector<128x128xf32>, vector<16x128xf32> -> vector<16x128xf32>
    %c0_3 = arith.constant 0 : index
    %c0_4 = arith.constant 0 : index
    %3 = vector.load %arg4[%c0_3, %c0_4] : memref<1x128xf32, #tpu.memory_space<vmem>>, vector<1x128xf32>
    %4 = vector.broadcast %3 : vector<1x128xf32> to vector<16x128xf32>
    %5 = arith.addf %2, %4 : vector<16x128xf32>
    %cst_5 = arith.constant 0.000000e+00 : f32
    %6 = vector.broadcast %cst_5 : f32 to vector<16x128xf32>
    %7 = arith.maximumf %5, %6 : vector<16x128xf32>
    %c0_6 = arith.constant 0 : index
    %c0_7 = arith.constant 0 : index
    %8 = vector.load %arg5[%c0_6, %c0_7] : memref<128x128xf32, #tpu.memory_space<vmem>>, vector<128x128xf32>
    %cst_8 = arith.constant dense<0.000000e+00> : vector<16x128xf32>
    %9 = tpu.matmul %7, %8, %cst_8 {dimension_numbers = #tpu.dot_dimension_numbers<[1], [0], [0], [1], [0, 0, 1, 1], [], []>} : vector<16x128xf32>, vector<128x128xf32>, vector<16x128xf32> -> vector<16x128xf32>
    %c0_i32 = arith.constant 0 : i32
    %10 = arith.cmpi eq, %arg1, %c0_i32 : i32
    %11 = arith.extui %10 : i1 to i32
    %c0_i32_9 = arith.constant 0 : i32
    %12 = arith.cmpi ne, %11, %c0_i32_9 : i32
    scf.if %12 {
      %c0_14 = arith.constant 0 : index
      %c0_15 = arith.constant 0 : index
      %19 = vector.load %arg10[%c0_14, %c0_15] : memref<16x128xf32, #tpu.memory_space<vmem>>, vector<16x128xf32>
      tpu.vector_store %arg10[%c0_14, %c0_15], %9 {strides = array<i32>} : memref<16x128xf32, #tpu.memory_space<vmem>>, vector<16x128xf32>,
    } else {
    }
    %c0_i32_10 = arith.constant 0 : i32
    %13 = arith.cmpi sgt, %arg1, %c0_i32_10 : i32
    %14 = arith.extui %13 : i1 to i32
    %c0_i32_11 = arith.constant 0 : i32
    %15 = arith.cmpi ne, %14, %c0_i32_11 : i32
    scf.if %15 {
      %c0_14 = arith.constant 0 : index
      %c0_15 = arith.constant 0 : index
      %19 = vector.load %arg10[%c0_14, %c0_15] : memref<16x128xf32, #tpu.memory_space<vmem>>, vector<16x128xf32>
      %20 = arith.addf %19, %9 : vector<16x128xf32>
      %c0_16 = arith.constant 0 : index
      %c0_17 = arith.constant 0 : index
      %21 = vector.load %arg10[%c0_16, %c0_17] : memref<16x128xf32, #tpu.memory_space<vmem>>, vector<16x128xf32>
      tpu.vector_store %arg10[%c0_16, %c0_17], %20 {strides = array<i32>} : memref<16x128xf32, #tpu.memory_space<vmem>>, vector<16x128xf32>,
    } else {
    }
    %c0_i32_12 = arith.constant 0 : i32
    %16 = arith.cmpi eq, %arg1, %c0_i32_12 : i32
    %17 = arith.extui %16 : i1 to i32
    %c0_i32_13 = arith.constant 0 : i32
    %18 = arith.cmpi ne, %17, %c0_i32_13 : i32
    scf.if %18 {
      %c0_14 = arith.constant 0 : index
      %c0_15 = arith.constant 0 : index
      %19 = vector.load %arg10[%c0_14, %c0_15] : memref<16x128xf32, #tpu.memory_space<vmem>>, vector<16x128xf32>
      %c0_16 = arith.constant 0 : index
      %c0_17 = arith.constant 0 : index
      %20 = vector.load %arg6[%c0_16, %c0_17] : memref<1x128xf32, #tpu.memory_space<vmem>>, vector<1x128xf32>
      %21 = vector.broadcast %20 : vector<1x128xf32> to vector<16x128xf32>
      %22 = arith.addf %19, %21 : vector<16x128xf32>
      %23 = arith.addf %22, %0 : vector<16x128xf32>
      %cst_18 = arith.constant dense<0.000000e+00> : vector<16xf32>
      %24 = vector.multi_reduction <add>, %23, %cst_18 [1] : vector<16x128xf32> to vector<16xf32>
      %25 = vector.shape_cast %24 : vector<16xf32> to vector<16x1xf32>
      %26 = arith.mulf %23, %23 : vector<16x128xf32>
      %cst_19 = arith.constant dense<0.000000e+00> : vector<16xf32>
      %27 = vector.multi_reduction <add>, %26, %cst_19 [1] : vector<16x128xf32> to vector<16xf32>
      %28 = vector.shape_cast %27 : vector<16xf32> to vector<16x1xf32>
      %cst_20 = arith.constant 3.125000e-02 : f32
      %29 = vector.broadcast %cst_20 : f32 to vector<16x1xf32>
      %30 = arith.mulf %25, %29 : vector<16x1xf32>
      %cst_21 = arith.constant 3.125000e-02 : f32
      %31 = vector.broadcast %cst_21 : f32 to vector<16x1xf32>
      %32 = arith.mulf %28, %31 : vector<16x1xf32>
      %33 = arith.mulf %30, %30 : vector<16x1xf32>
      %34 = arith.subf %32, %33 : vector<16x1xf32>
      %cst_22 = arith.constant 0.000000e+00 : f32
      %35 = vector.broadcast %cst_22 : f32 to vector<16x1xf32>
      %36 = arith.maximumf %34, %35 : vector<16x1xf32>
      %cst_23 = arith.constant 9.99999974E-6 : f32
      %37 = vector.broadcast %cst_23 : f32 to vector<16x1xf32>
      %38 = arith.addf %36, %37 : vector<16x1xf32>
      %39 = math.rsqrt %38 : vector<16x1xf32>
      %c0_24 = arith.constant 0 : index
      %c0_25 = arith.constant 0 : index
      %40 = vector.load %arg7[%c0_24, %c0_25] : memref<1x128xf32, #tpu.memory_space<vmem>>, vector<1x128xf32>
      %41 = vector.broadcast %39 : vector<16x1xf32> to vector<16x128xf32>
      %42 = vector.broadcast %40 : vector<1x128xf32> to vector<16x128xf32>
      %43 = arith.mulf %41, %42 : vector<16x128xf32>
      %44 = vector.broadcast %30 : vector<16x1xf32> to vector<16x128xf32>
      %45 = arith.subf %23, %44 : vector<16x128xf32>
      %46 = arith.mulf %45, %43 : vector<16x128xf32>
      %c0_26 = arith.constant 0 : index
      %c0_27 = arith.constant 0 : index
      %47 = vector.load %arg8[%c0_26, %c0_27] : memref<1x128xf32, #tpu.memory_space<vmem>>, vector<1x128xf32>
      %48 = vector.broadcast %47 : vector<1x128xf32> to vector<16x128xf32>
      %49 = arith.addf %46, %48 : vector<16x128xf32>
      %c0_28 = arith.constant 0 : index
      %c0_29 = arith.constant 0 : index
      %50 = vector.load %arg9[%c0_28, %c0_29] : memref<16x128xf32, #tpu.memory_space<vmem>>, vector<16x128xf32>
      tpu.vector_store %arg9[%c0_28, %c0_29], %49 {strides = array<i32>} : memref<16x128xf32, #tpu.memory_space<vmem>>, vector<16x128xf32>,
    } else {
    }
    return
  }
  func.func @transform_0(%arg0: i32, %arg1: i32) -> (i32, i32) {
    %c0_i32 = arith.constant 0 : i32
    %c0_i32_0 = arith.constant 0 : i32
    return %arg0, %c0_i32 : i32, i32
  }
  func.func @transform_1(%arg0: i32, %arg1: i32) -> (i32, i32) {
    %c0_i32 = arith.constant 0 : i32
    %c0_i32_0 = arith.constant 0 : i32
    return %c0_i32, %arg1 : i32, i32
  }
  func.func @transform_2(%arg0: i32, %arg1: i32) -> (i32, i32) {
    %c0_i32 = arith.constant 0 : i32
    %c0_i32_0 = arith.constant 0 : i32
    return %c0_i32, %arg1 : i32, i32
  }
  func.func @transform_3(%arg0: i32, %arg1: i32) -> (i32, i32) {
    %c0_i32 = arith.constant 0 : i32
    %c0_i32_0 = arith.constant 0 : i32
    return %arg1, %c0_i32 : i32, i32
  }
  func.func @transform_4(%arg0: i32, %arg1: i32) -> (i32, i32) {
    %c0_i32 = arith.constant 0 : i32
    %c0_i32_0 = arith.constant 0 : i32
    %c0_i32_1 = arith.constant 0 : i32
    return %c0_i32, %c0_i32_0 : i32, i32
  }
  func.func @transform_5(%arg0: i32, %arg1: i32) -> (i32, i32) {
    %c0_i32 = arith.constant 0 : i32
    %c0_i32_0 = arith.constant 0 : i32
    %c0_i32_1 = arith.constant 0 : i32
    return %c0_i32, %c0_i32_0 : i32, i32
  }
  func.func @transform_6(%arg0: i32, %arg1: i32) -> (i32, i32) {
    %c0_i32 = arith.constant 0 : i32
    %c0_i32_0 = arith.constant 0 : i32
    %c0_i32_1 = arith.constant 0 : i32
    return %c0_i32, %c0_i32_0 : i32, i32
  }
  func.func @transform_7(%arg0: i32, %arg1: i32) -> (i32, i32) {
    %c0_i32 = arith.constant 0 : i32
    %c0_i32_0 = arith.constant 0 : i32
    return %arg0, %c0_i32 : i32, i32
  }
}

</mosaic_0001>

<llo_original>
// kernel: _ffn_impl.1
$region0: #{_ffn_impl.1}
  #allocation0 [shape = 'u32[]', space=smem, size = 0x4, offset = 0x4, fixed_abs, tag = 'smem constant byte address 0x4 - core index']
  #allocation1 [shape = 'u32[144,128]{1,0:T(1,128)}', space=vmem, size = 0x12000, scoped, tag = 'internal scratch']
  #allocation2 [shape = 'f32[16,128]{1,0:T(8,128)}', space=vmem, size = 0x2000, scoped, tag = 'scratch operand']
  %s0 = inlined_call_operand.vmem [shape: f32[16,128], index: 0, kind: input, shape index: {}]
  %s1 = inlined_call_operand.vmem [shape: f32[128,128], index: 1, kind: input, shape index: {}]
  %s2 = inlined_call_operand.vmem [shape: f32[1,128], index: 2, kind: input, shape index: {}]
  %s3 = inlined_call_operand.vmem [shape: f32[128,128], index: 3, kind: input, shape index: {}]
  %s4 = inlined_call_operand.vmem [shape: f32[1,128], index: 4, kind: input, shape index: {}]
  %s5 = inlined_call_operand.vmem [shape: f32[1,128], index: 5, kind: input, shape index: {}]
  %s6 = inlined_call_operand.vmem [shape: f32[1,128], index: 6, kind: input, shape index: {}]
  %s7 = inlined_call_operand.vmem [shape: f32[16,128], index: 7, kind: output, shape index: {}]
  %s8 = sld [smem:[#allocation0]]
  $region50: #{_ffn_impl.1} parent=0
    _
  %s10 = ssub.s32 1, %s8
  %s11 = scalar_select 0, %s10, %s8
  // Predicated region
  $region2: #{_ffn_impl.1} parent=0 // pred_check
    _
  $region3: #{_ffn_impl.1} parent=0 // pred_check_branch
    %13 = sbr.rel (0) target = $region5
  $region4: #{_ffn_impl.1} parent=0 // pred_region
    _
  $region5: #{_ffn_impl.1} parent=0 // pred_fallthru
    _
  // Predicated region
  $region6: #{_ffn_impl.1} parent=0 // pred_check
    _
  $region7: #{_ffn_impl.1} parent=0 // pred_check_branch
    %15 = sbr.rel (0) target = $region9
  $region8: #{_ffn_impl.1} parent=0 // pred_region
    _
  $region9: #{_ffn_impl.1} parent=0 // pred_fallthru
    _
  // Predicated region
  $region10: #{_ffn_impl.1} parent=0 // pred_check
    _
  $region11: #{_ffn_impl.1} parent=0 // pred_check_branch
    %17 = sbr.rel (0) target = $region13
  $region12: #{_ffn_impl.1} parent=0 // pred_region
    _
  $region13: #{_ffn_impl.1} parent=0 // pred_fallthru
    _
  // Predicated region
  $region14: #{_ffn_impl.1} parent=0 // pred_check
    _
  $region15: #{_ffn_impl.1} parent=0 // pred_check_branch
    %19 = sbr.rel (0) target = $region17
  $region16: #{_ffn_impl.1} parent=0 // pred_region
    _
  $region17: #{_ffn_impl.1} parent=0 // pred_fallthru
    _
  // Predicated region
  $region18: #{_ffn_impl.1} parent=0 // pred_check
    _
  $region19: #{_ffn_impl.1} parent=0 // pred_check_branch
    %21 = sbr.rel (0) target = $region21
  $region20: #{_ffn_impl.1} parent=0 // pred_region
    _
  $region21: #{_ffn_impl.1} parent=0 // pred_fallthru
    _
  // Predicated region
  $region22: #{_ffn_impl.1} parent=0 // pred_check
    _
  $region23: #{_ffn_impl.1} parent=0 // pred_check_branch
    %23 = sbr.rel (0) target = $region25
  $region24: #{_ffn_impl.1} parent=0 // pred_region
    _
  $region25: #{_ffn_impl.1} parent=0 // pred_fallthru
    _
  // Predicated region
  $region26: #{_ffn_impl.1} parent=0 // pred_check
    _
  $region27: #{_ffn_impl.1} parent=0 // pred_check_branch
    %25 = sbr.rel (0) target = $region29
  $region28: #{_ffn_impl.1} parent=0 // pred_region
    _
  $region29: #{_ffn_impl.1} parent=0 // pred_fallthru
    _
  %v26 = vld [vmem:[%s0] sm:$0xff]
  %v27 = vld [vmem:[%s0 + $0x8] sm:$0xff]
  %v28 = vld [vmem:[%s1] sm:$0xff]
  %v29 = vld [vmem:[%s1 + $0x8] sm:$0xff]
  %v30 = vld [vmem:[%s1 + $0x10] sm:$0xff]
  %v31 = vld [vmem:[%s1 + $0x18] sm:$0xff]
  %v32 = vld [vmem:[%s1 + $0x20] sm:$0xff]
  %v33 = vld [vmem:[%s1 + $0x28] sm:$0xff]
  %v34 = vld [vmem:[%s1 + $0x30] sm:$0xff]
  %v35 = vld [vmem:[%s1 + $0x38] sm:$0xff]
  %v36 = vld [vmem:[%s1 + $0x40] sm:$0xff]
  %v37 = vld [vmem:[%s1 + $0x48] sm:$0xff]
  %v38 = vld [vmem:[%s1 + $0x50] sm:$0xff]
  %v39 = vld [vmem:[%s1 + $0x58] sm:$0xff]
  %v40 = vld [vmem:[%s1 + $0x60] sm:$0xff]
  %v41 = vld [vmem:[%s1 + $0x68] sm:$0xff]
  %v42 = vld [vmem:[%s1 + $0x70] sm:$0xff]
  %v43 = vld [vmem:[%s1 + $0x78] sm:$0xff]
  %v44 = vld [vmem:[%s2] sm:$0x1]
  %v46 = vlaneseq
  %v47 = vshrl.u32 %v46, 7
  %v48 = vsub.s32 0, %v47
  %v49 = vrot.slane %v44, %v48
  %51 = vmatprep.subr.mxu0 0.0
  %52 = vmatpush1.msra.mxu0 %v43
  %53 = vmatprep.subr.mxu0 0.0
  %54 = vmatpush1.msra.mxu0 %v42
  %55 = vmatprep.subr.mxu0 0.0
  %56 = vmatpush1.msra.mxu0 %v41
  %57 = vmatprep.subr.mxu0 0.0
  %58 = vmatpush1.msra.mxu0 %v40
  %59 = vmatprep.subr.mxu0 0.0
  %60 = vmatpush1.msra.mxu0 %v39
  %61 = vmatprep.subr.mxu0 0.0
  %62 = vmatpush1.msra.mxu0 %v38
  %63 = vmatprep.subr.mxu0 0.0
  %64 = vmatpush1.msra.mxu0 %v37
  %65 = vmatprep.subr.mxu0 0.0
  %66 = vmatpush1.msra.mxu0 %v36
  %67 = vmatprep.subr.mxu0 0.0
  %68 = vmatpush1.msra.mxu0 %v35
  %69 = vmatprep.subr.mxu0 0.0
  %70 = vmatpush1.msra.mxu0 %v34
  %71 = vmatprep.subr.mxu0 0.0
  %72 = vmatpush1.msra.mxu0 %v33
  %73 = vmatprep.subr.mxu0 0.0
  %74 = vmatpush1.msra.mxu0 %v32
  %75 = vmatprep.subr.mxu0 0.0
  %76 = vmatpush1.msra.mxu0 %v31
  %77 = vmatprep.subr.mxu0 0.0
  %78 = vmatpush1.msra.mxu0 %v30
  %79 = vmatprep.subr.mxu0 0.0
  %80 = vmatpush1.msra.mxu0 %v29
  %81 = vmatprep.subr.mxu0 0.0
  %82 = vmatpush1.msra.mxu0 %v28
  %83 = vmatprep.subr.mxu0 0.0
  %84 = vmatpush2.msra.mxu0 0.0
  %85 = vmatprep.subr.mxu0 0.0
  %86 = vmatpush2.msra.mxu0 0.0
  %87 = vmatprep.subr.mxu0 0.0
  %88 = vmatpush2.msra.mxu0 0.0
  %89 = vmatprep.subr.mxu0 0.0
  %90 = vmatpush2.msra.mxu0 0.0
  %91 = vmatprep.subr.mxu0 0.0
  %92 = vmatpush2.msra.mxu0 0.0
  %93 = vmatprep.subr.mxu0 0.0
  %94 = vmatpush2.msra.mxu0 0.0
  %95 = vmatprep.subr.mxu0 0.0
  %96 = vmatpush2.msra.mxu0 0.0
  %97 = vmatprep.subr.mxu0 0.0
  %98 = vmatpush2.msra.mxu0 0.0
  %99 = vmatprep.subr.mxu0 0.0
  %100 = vmatpush2.msra.mxu0 0.0
  %101 = vmatprep.subr.mxu0 0.0
  %102 = vmatpush2.msra.mxu0 0.0
  %103 = vmatprep.subr.mxu0 0.0
  %104 = vmatpush2.msra.mxu0 0.0
  %105 = vmatprep.subr.mxu0 0.0
  %106 = vmatpush2.msra.mxu0 0.0
  %107 = vmatprep.subr.mxu0 0.0
  %108 = vmatpush2.msra.mxu0 0.0
  %109 = vmatprep.subr.mxu0 0.0
  %110 = vmatpush2.msra.mxu0 0.0
  %111 = vmatprep.subr.mxu0 0.0
  %112 = vmatpush2.msra.mxu0 0.0
  %113 = vmatprep.subr.mxu0 0.0
  %114 = vmatpush2.msra.mxu0 0.0
  %115 = vmatprep.mubr.f32.mxu0 0.0
  %116 = vmatmul.mubr.f32.gmra.mxu0 %v26
  %v117 = vpop.f32.mrf.mxu0
  %v118 = vadd.f32 %v49, %v117
  %v119 = vpop.f32.mrf.mxu0
  %120 = vmatprep.mubr.f32.mxu0 0.0
  %121 = vmatmul.mubr.f32.gmra.mxu0 %v27
  %v122 = vpop.f32.mrf.mxu0
  %v123 = vadd.f32 %v49, %v122
  %v124 = vpop.f32.mrf.mxu0
  %125 = vdwg.mxu0
  %v126 = vmax.f32 %v118, 0.0
  %v127 = vmax.f32 %v123, 0.0
  %v128 = vld [vmem:[%s3] sm:$0xff]
  %v129 = vld [vmem:[%s3 + $0x8] sm:$0xff]
  %v130 = vld [vmem:[%s3 + $0x10] sm:$0xff]
  %v131 = vld [vmem:[%s3 + $0x18] sm:$0xff]
  %v132 = vld [vmem:[%s3 + $0x20] sm:$0xff]
  %v133 = vld [vmem:[%s3 + $0x28] sm:$0xff]
  %v134 = vld [vmem:[%s3 + $0x30] sm:$0xff]
  %v135 = vld [vmem:[%s3 + $0x38] sm:$0xff]
  %v136 = vld [vmem:[%s3 + $0x40] sm:$0xff]
  %v137 = vld [vmem:[%s3 + $0x48] sm:$0xff]
  %v138 = vld [vmem:[%s3 + $0x50] sm:$0xff]
  %v139 = vld [vmem:[%s3 + $0x58] sm:$0xff]
  %v140 = vld [vmem:[%s3 + $0x60] sm:$0xff]
  %v141 = vld [vmem:[%s3 + $0x68] sm:$0xff]
  %v142 = vld [vmem:[%s3 + $0x70] sm:$0xff]
  %v143 = vld [vmem:[%s3 + $0x78] sm:$0xff]
  %144 = vmatprep.subr.mxu0 0.0
  %145 = vmatpush1.msra.mxu0 %v143
  %146 = vmatprep.subr.mxu0 0.0
  %147 = vmatpush1.msra.mxu0 %v142
  %148 = vmatprep.subr.mxu0 0.0
  %149 = vmatpush1.msra.mxu0 %v141
  %150 = vmatprep.subr.mxu0 0.0
  %151 = vmatpush1.msra.mxu0 %v140
  %152 = vmatprep.subr.mxu0 0.0
  %153 = vmatpush1.msra.mxu0 %v139
  %154 = vmatprep.subr.mxu0 0.0
  %155 = vmatpush1.msra.mxu0 %v138
  %156 = vmatprep.subr.mxu0 0.0
  %157 = vmatpush1.msra.mxu0 %v137
  %158 = vmatprep.subr.mxu0 0.0
  %159 = vmatpush1.msra.mxu0 %v136
  %160 = vmatprep.subr.mxu0 0.0
  %161 = vmatpush1.msra.mxu0 %v135
  %162 = vmatprep.subr.mxu0 0.0
  %163 = vmatpush1.msra.mxu0 %v134
  %164 = vmatprep.subr.mxu0 0.0
  %165 = vmatpush1.msra.mxu0 %v133
  %166 = vmatprep.subr.mxu0 0.0
  %167 = vmatpush1.msra.mxu0 %v132
  %168 = vmatprep.subr.mxu0 0.0
  %169 = vmatpush1.msra.mxu0 %v131
  %170 = vmatprep.subr.mxu0 0.0
  %171 = vmatpush1.msra.mxu0 %v130
  %172 = vmatprep.subr.mxu0 0.0
  %173 = vmatpush1.msra.mxu0 %v129
  %174 = vmatprep.subr.mxu0 0.0
  %175 = vmatpush1.msra.mxu0 %v128
  %176 = vmatprep.subr.mxu0 0.0
  %177 = vmatpush2.msra.mxu0 0.0
  %178 = vmatprep.subr.mxu0 0.0
  %179 = vmatpush2.msra.mxu0 0.0
  %180 = vmatprep.subr.mxu0 0.0
  %181 = vmatpush2.msra.mxu0 0.0
  %182 = vmatprep.subr.mxu0 0.0
  %183 = vmatpush2.msra.mxu0 0.0
  %184 = vmatprep.subr.mxu0 0.0
  %185 = vmatpush2.msra.mxu0 0.0
  %186 = vmatprep.subr.mxu0 0.0
  %187 = vmatpush2.msra.mxu0 0.0
  %188 = vmatprep.subr.mxu0 0.0
  %189 = vmatpush2.msra.mxu0 0.0
  %190 = vmatprep.subr.mxu0 0.0
  %191 = vmatpush2.msra.mxu0 0.0
  %192 = vmatprep.subr.mxu0 0.0
  %193 = vmatpush2.msra.mxu0 0.0
  %194 = vmatprep.subr.mxu0 0.0
  %195 = vmatpush2.msra.mxu0 0.0
  %196 = vmatprep.subr.mxu0 0.0
  %197 = vmatpush2.msra.mxu0 0.0
  %198 = vmatprep.subr.mxu0 0.0
  %199 = vmatpush2.msra.mxu0 0.0
  %200 = vmatprep.subr.mxu0 0.0
  %201 = vmatpush2.msra.mxu0 0.0
  %202 = vmatprep.subr.mxu0 0.0
  %203 = vmatpush2.msra.mxu0 0.0
  %204 = vmatprep.subr.mxu0 0.0
  %205 = vmatpush2.msra.mxu0 0.0
  %206 = vmatprep.subr.mxu0 0.0
  %207 = vmatpush2.msra.mxu0 0.0
  %208 = vmatprep.mubr.f32.mxu0 0.0
  %209 = vmatmul.mubr.f32.gmra.mxu0 %v126
  %v210 = vpop.f32.mrf.mxu0
  %v211 = vadd.f32 0.0, %v210
  %v212 = vpop.f32.mrf.mxu0
  %213 = vmatprep.mubr.f32.mxu0 0.0
  %214 = vmatmul.mubr.f32.gmra.mxu0 %v127
  %v215 = vpop.f32.mrf.mxu0
  %v216 = vadd.f32 0.0, %v215
  %v217 = vpop.f32.mrf.mxu0
  %218 = vdwg.mxu0
  %p219 = scmp.eq.s32.totalorder 0, 0
  // Predicated region
  $region30: #{_ffn_impl.1} parent=0 // pred_check
    %p220 = pneg %p219
  $region31: #{_ffn_impl.1} parent=0 // pred_check_branch
    %222 = sbr.rel (%p220) target = $region33
  $region32: #{_ffn_impl.1} parent=0 // pred_region
    %223 = vst [vmem:[#allocation2] sm:$0xff] %v211
    %224 = vst [vmem:[#allocation2 + $0x8] sm:$0xff] %v216
  $region33: #{_ffn_impl.1} parent=0 // pred_fallthru
    _
  %p225 = scmp.gt.s32.totalorder 0, 0
  // Predicated region
  $region34: #{_ffn_impl.1} parent=0 // pred_check
    %p226 = pneg %p225
  $region35: #{_ffn_impl.1} parent=0 // pred_check_branch
    %228 = sbr.rel (%p226) target = $region37
  $region36: #{_ffn_impl.1} parent=0 // pred_region
    %v229 = vld [vmem:[#allocation2] sm:$0xff]
    %v230 = vld [vmem:[#allocation2 + $0x8] sm:$0xff]
    %v231 = vadd.f32 %v229, %v211
    %v232 = vadd.f32 %v230, %v216
    %233 = vst [vmem:[#allocation2] sm:$0xff] %v231
    %234 = vst [vmem:[#allocation2 + $0x8] sm:$0xff] %v232
  $region37: #{_ffn_impl.1} parent=0 // pred_fallthru
    _
  // Predicated region
  $region38: #{_ffn_impl.1} parent=0 // pred_check
    %p235 = pneg %p219
  $region39: #{_ffn_impl.1} parent=0 // pred_check_branch
    %237 = sbr.rel (%p235) target = $region41
  $region40: #{_ffn_impl.1} parent=0 // pred_region
    %v238 = vld [vmem:[#allocation2] sm:$0xff]
    %v239 = vld [vmem:[#allocation2 + $0x8] sm:$0xff]
    %v240 = vld [vmem:[%s4] sm:$0x1]
    %v242 = vlaneseq
    %v243 = vshrl.u32 %v242, 7
    %v244 = vsub.s32 0, %v243
    %v245 = vrot.slane %v240, %v244
    %v247 = vadd.f32 %v238, %v245
    %v248 = vadd.f32 %v239, %v245
    %v249 = vadd.f32 %v247, %v26
    %v250 = vadd.f32 %v248, %v27
    %251 = vadd.xlane.f32.xlu0 %v249
    %v252 = vpop.xlane.xlu0 %251
    %253 = vadd.xlane.f32.xlu0 %v250
    %v254 = vpop.xlane.xlu0 %253
    %v255 = vmul.f32 %v249, %v249
    %v256 = vmul.f32 %v250, %v250
    %257 = vadd.xlane.f32.xlu0 %v255
    %v258 = vpop.xlane.xlu0 %257
    %259 = vadd.xlane.f32.xlu0 %v256
    %v260 = vpop.xlane.xlu0 %259
    %v261 = vmul.f32 %v252, 0.03125
    %v262 = vmul.f32 %v254, 0.03125
    %v263 = vmul.f32 %v258, 0.03125
    %v264 = vmul.f32 %v260, 0.03125
    %v265 = vmul.f32 %v261, %v261
    %v266 = vmul.f32 %v262, %v262
    %v267 = vsub.f32 %v263, %v265
    %v268 = vsub.f32 %v264, %v266
    %v269 = vmax.f32 %v267, 0.0
    %v270 = vmax.f32 %v268, 0.0
    %v271 = vadd.f32 %v269, 1e-05
    %v272 = vadd.f32 %v270, 1e-05
    %v273 = vrsqrt.pop %v271
    %v274 = vrsqrt.pop %v272
    %v275 = vld [vmem:[%s5] sm:$0x1]
    %v277 = vlaneseq
    %v278 = vshrl.u32 %v277, 7
    %v279 = vsub.s32 0, %v278
    %v280 = vrot.slane %v275, %v279
    %v282 = vmul.f32 %v273, %v280
    %v283 = vmul.f32 %v274, %v280
    %v284 = vsub.f32 %v249, %v261
    %v285 = vsub.f32 %v250, %v262
    %v286 = vmul.f32 %v284, %v282
    %v287 = vmul.f32 %v285, %v283
    %v288 = vld [vmem:[%s6] sm:$0x1]
    %v290 = vlaneseq
    %v291 = vshrl.u32 %v290, 7
    %v292 = vsub.s32 0, %v291
    %v293 = vrot.slane %v288, %v292
    %v295 = vadd.f32 %v286, %v293
    %v296 = vadd.f32 %v287, %v293
    %297 = vst [vmem:[%s7] sm:$0xff] %v295
    %298 = vst [vmem:[%s7 + $0x8] sm:$0xff] %v296
  $region41: #{_ffn_impl.1} parent=0 // pred_fallthru
    _
  // Predicated region
  $region42: #{_ffn_impl.1} parent=0 // pred_check
    _
  $region43: #{_ffn_impl.1} parent=0 // pred_check_branch
    %300 = sbr.rel (0) target = $region45
  $region44: #{_ffn_impl.1} parent=0 // pred_region
    _
  $region45: #{_ffn_impl.1} parent=0 // pred_fallthru
    _
  // Predicated region
  $region46: #{_ffn_impl.1} parent=0 // pred_check
    _
  $region47: #{_ffn_impl.1} parent=0 // pred_check_branch
    %302 = sbr.rel (0) target = $region49
  $region48: #{_ffn_impl.1} parent=0 // pred_region
    _
  $region49: #{_ffn_impl.1} parent=0 // pred_fallthru
    _

</llo_original>
